<compile_context>
chip_gen: v7x
topology: tpu7x:2x2x1
jax: 0.10.0
libtpu: 0.0.40
codegen_flags: <defaults>
</compile_context>

<pallas_src>
from typing import NamedTuple

import jax
import jax.numpy as jnp
from jax.experimental import pallas as pl
from jax.experimental.pallas import tpu as pltpu


# ----------------------------------------------------------------------------
# Kernel
# ----------------------------------------------------------------------------
def fd_kernel(x_ref, w1_ref, b1_ref, w3_ref, b3_ref, o_ref):
    """One batch tile: o = relu(x @ W1 + b1) @ W3 + b3 (bias + ReLU in f32)."""
    # Cast x to the matmul/weight dtype (no-op for f32; bf16 halves MXU time
    # and weight traffic).  The MXU accumulates in f32 either way.
    x = x_ref[...].astype(w1_ref.dtype)
    h = jnp.dot(x, w1_ref[...], preferred_element_type=jnp.float32)
    h = jnp.maximum(h + b1_ref[...], 0.0)                    # b1 is f32
    # NOTE: in the bf16 path the fc1 activation is truncated to bf16 before
    # the second matmul (documented accuracy/perf trade-off; f32 path exact).
    y = jnp.dot(h.astype(w3_ref.dtype), w3_ref[...],
                preferred_element_type=jnp.float32)
    o_ref[...] = (y + b3_ref[...]).astype(o_ref.dtype)       # b3 is f32


# ----------------------------------------------------------------------------
# Parameter preparation (done once, outside the forward path)
# ----------------------------------------------------------------------------
class FDParams(NamedTuple):
    # Unpadded (fast path).
    w1: jax.Array            # (in, in), matmul dtype
    b1: jax.Array            # (1, in),  f32
    w3: jax.Array            # (in, out), matmul dtype
    b3: jax.Array            # (1, out), f32
    # Lane-padded (tiled path); alias the unpadded arrays when already aligned.
    w1p: jax.Array
    b1p: jax.Array
    w3p: jax.Array
    b3p: jax.Array
    in_size: int
    out_size: int
    in_p: int
    out_p: int


def _round_up(x, m):
    return pl.cdiv(x, m) * m


def prepare_params(w1_t, b1, w3_t, b3, *, matmul_dtype=None, lane_multiple=128):
    """Pads / casts the weights once so per-call forward does no weight work.

    w1_t: (in, in), w3_t: (in, out) -- nn.Linear weights stored transposed.
    matmul_dtype: e.g. jnp.bfloat16 for ~2-4x MXU throughput and half the
      weight HBM/VMEM traffic (MXU still accumulates f32, bias/ReLU stay f32).
    lane_multiple: 128 works on all chips; 256 can better feed the 256x256 MXU
      on v6e/v7x when the extra padded traffic is acceptable.
    """
    in_size = int(w1_t.shape[0])
    out_size = int(w3_t.shape[1])
    wdt = jnp.dtype(matmul_dtype) if matmul_dtype is not None else w1_t.dtype

    w1 = w1_t.astype(wdt)
    w3 = w3_t.astype(wdt)
    b1_2d = b1.reshape(1, in_size).astype(jnp.float32)
    b3_2d = b3.reshape(1, out_size).astype(jnp.float32)

    in_p = _round_up(in_size, lane_multiple)
    out_p = _round_up(out_size, lane_multiple)

    if in_p == in_size:
        w1p, b1p = w1, b1_2d
    else:
        w1p = jnp.zeros((in_p, in_p), wdt).at[:in_size, :in_size].set(w1)
        b1p = jnp.zeros((1, in_p), jnp.float32).at[:, :in_size].set(b1_2d)
    if in_p == in_size and out_p == out_size:
        w3p, b3p = w3, b3_2d
    else:
        w3p = jnp.zeros((in_p, out_p), wdt).at[:in_size, :out_size].set(w3)
        b3p = jnp.zeros((1, out_p), jnp.float32).at[:, :out_size].set(b3_2d)

    return FDParams(w1, b1_2d, w3, b3_2d, w1p, b1p, w3p, b3p,
                    in_size, out_size, in_p, out_p)


# ----------------------------------------------------------------------------
# Tiling / VMEM budgeting
# ----------------------------------------------------------------------------
def _vmem_capacity_bytes():
    try:
        return int(pltpu.get_tpu_info().vmem_capacity_bytes)
    except Exception:
        return 64 * 1024 * 1024   # conservative default (v7x per-TC VMEM)


def _choose_batch_tiling(B, in_p, out_p, x_bytes, w_bytes, max_batch_tile):
    """Derive (tile_rows, num_tiles, padded_batch, vmem_limit) from the chip's
    VMEM capacity.  Weights are resident; the compiler allocates 2 buffers per
    input block by default, so budget 2x for them even though their block
    index never changes (keeps us from overrunning VMEM without relying on
    single-buffering support)."""
    vmem_cap = _vmem_capacity_bytes()
    resident = 2 * ((in_p * in_p + in_p * out_p) * w_bytes
                    + (in_p + out_p) * 4)
    # Per batch-row VMEM: double-buffered x tile + double-buffered out tile
    # + f32 fc1 activation + f32 fc3 accumulator.
    per_row = 2 * in_p * x_bytes + 2 * out_p * x_bytes + in_p * 4 + out_p * 4
    budget = int(0.8 * vmem_cap) - resident
    if budget > 0:
        rows = max(8, min(max_batch_tile, (budget // per_row) // 8 * 8))
    else:
        rows = 8   # weights alone nearly fill VMEM; fall back to tiny tiles

    b8 = _round_up(B, 8)
    num_tiles = pl.cdiv(b8, rows)
    # Guarantee >=2 grid steps for mid/large batches so the "parallel" batch
    # axis can actually shard across the two TensorCores on v7x.
    if num_tiles == 1 and b8 >= 256:
        num_tiles = 2
    tb = _round_up(pl.cdiv(b8, num_tiles), 8)     # balanced: minimal zero rows
    num_tiles = pl.cdiv(b8, tb)
    b_p = tb * num_tiles

    needed = resident + tb * per_row
    vmem_limit = max(32 * 1024 * 1024,
                     min(int(0.9 * vmem_cap), needed + (8 << 20)))
    return tb, num_tiles, b_p, vmem_limit


# ----------------------------------------------------------------------------
# Forward
# ----------------------------------------------------------------------------
_FAST_PATH_MAX_BYTES = 2 * 1024 * 1024   # whole problem comfortably in VMEM


def fd_model_forward(x, params: FDParams, *, max_batch_tile=2048):
    """relu(x @ W1 + b1) @ W3 + b3.  x: (B, in_size)."""
    B, in_size = x.shape
    assert in_size == params.in_size, (in_size, params.in_size)
    out_size = params.out_size
    dt = x.dtype
    x_bytes = jnp.dtype(dt).itemsize
    w_bytes = jnp.dtype(params.w1.dtype).itemsize

    # ---- fast path: single full-array block, no padding, no grid -----------
    est_bytes = ((x.size + B * out_size) * x_bytes
                 + (params.w1.size + params.w3.size) * w_bytes
                 + (B * in_size + B * out_size) * 4           # f32 intermediates
                 + (in_size + out_size) * 4)                  # biases
    if est_bytes <= _FAST_PATH_MAX_BYTES and B <= 1024:
        return pl.pallas_call(
            fd_kernel,
            out_shape=jax.ShapeDtypeStruct((B, out_size), dt),
            cost_estimate=pl.CostEstimate(
                flops=2 * B * in_size * (in_size + out_size),
                transcendentals=0,
                bytes_accessed=int(est_bytes)),
        )(x, params.w1, params.b1, params.w3, params.b3)

    # ---- tiled path ---------------------------------------------------------
    in_p, out_p = params.in_p, params.out_p
    tb, num_tiles, b_p, vmem_limit = _choose_batch_tiling(
        B, in_p, out_p, x_bytes, w_bytes, max_batch_tile)

    if (b_p, in_p) == x.shape:
        xp = x                                     # already aligned: no pad op
    else:
        xp = jnp.zeros((b_p, in_p), dt).at[:B, :in_size].set(x)

    cost = pl.CostEstimate(
        flops=2 * b_p * in_p * (in_p + out_p),
        transcendentals=0,
        bytes_accessed=int(xp.size * x_bytes
                           + (params.w1p.size + params.w3p.size) * w_bytes
                           + (in_p + out_p) * 4
                           + b_p * out_p * x_bytes))

    out_padded = pl.pallas_call(
        fd_kernel,
        out_shape=jax.ShapeDtypeStruct((b_p, out_p), dt),
        grid=(num_tiles,),
        in_specs=[
            pl.BlockSpec((tb, in_p), lambda i: (i, 0)),     # x: tiled over batch
            # Resident blocks (constant index): re-fetched only on index change;
            # the VMEM budget above already accounts for their default buffers.
            pl.BlockSpec((in_p, in_p), lambda i: (0, 0)),   # W1
            pl.BlockSpec((1, in_p), lambda i: (0, 0)),      # b1
            pl.BlockSpec((in_p, out_p), lambda i: (0, 0)),  # W3
            pl.BlockSpec((1, out_p), lambda i: (0, 0)),     # b3
        ],
        out_specs=pl.BlockSpec((tb, out_p), lambda i: (i, 0)),
        compiler_params=pltpu.CompilerParams(
            dimension_semantics=("parallel",),
            vmem_limit_bytes=vmem_limit),
        cost_estimate=cost,
    )(xp, params.w1p, params.b1p, params.w3p, params.b3p)

    if (b_p, out_p) == (B, out_size):
        return out_padded
    return out_padded[:B, :out_size]


# ----------------------------------------------------------------------------
# Deterministic init matching nn.Linear shapes (weights stored transposed)
# ----------------------------------------------------------------------------
def init_params(key, input_size, output_size):
    k1, k2, k3, k4 = jax.random.split(key, 4)
    bound = 1.0 / (input_size ** 0.5)
    # PyTorch nn.Linear weight is (out, in); we store the transpose (in, out).
    w1_t = jax.random.uniform(k1, (input_size, input_size), jnp.float32,
                              -bound, bound)
    b1 = jax.random.uniform(k2, (input_size,), jnp.float32, -bound, bound)
    w3_t = jax.random.uniform(k3, (input_size, output_size), jnp.float32,
                              -bound, bound)
    b3 = jax.random.uniform(k4, (output_size,), jnp.float32, -bound, bound)
    # TODO(synk): fc2 is initialized in the PyTorch module but never used in
    # forward, so it is intentionally omitted here.
    return w1_t, b1, w3_t, b3


if __name__ == "__main__":
    key = jax.random.PRNGKey(0)
    kx, kp, kx2, kp2 = jax.random.split(key, 4)

    # --- 1) demo-sized problem (fast path: no padding, no grid) --------------
    batch, input_size, output_size = 8, 32, 16
    x = jax.random.normal(kx, (batch, input_size), dtype=jnp.float32)
    w1_t, b1, w3_t, b3 = init_params(kp, input_size, output_size)
    params = prepare_params(w1_t, b1, w3_t, b3)

    out = fd_model_forward(x, params)
    jax.block_until_ready(out)
    ref = jnp.maximum(x @ w1_t + b1, 0.0) @ w3_t + b3
    assert out.shape == (batch, output_size)
    assert jnp.allclose(out, ref, atol=1e-5, rtol=1e-5)

    # --- 2) larger problem: exercises the batch-tiled (>=2-step grid) path ---
    B2, in2, out2 = 384, 512, 256
    x2 = jax.random.normal(kx2, (B2, in2), dtype=jnp.float32)
    w1b, b1b, w3b, b3b = init_params(kp2, in2, out2)
    params2 = prepare_params(w1b, b1b, w3b, b3b)
    out2_k = fd_model_forward(x2, params2)
    jax.block_until_ready(out2_k)
    hi = jax.lax.Precision.HIGHEST
    ref2 = jnp.maximum(jnp.dot(x2, w1b, precision=hi) + b1b, 0.0)
    ref2 = jnp.dot(ref2, w3b, precision=hi) + b3b
    assert out2_k.shape == (B2, out2)
    assert jnp.allclose(out2_k, ref2, atol=2e-2, rtol=2e-2)

    # --- 3) bf16-matmul path (f32 accumulate, f32 bias + ReLU) ---------------
    params2_bf16 = prepare_params(w1b, b1b, w3b, b3b, matmul_dtype=jnp.bfloat16)
    out2_bf16 = fd_model_forward(x2, params2_bf16)
    jax.block_until_ready(out2_bf16)
    assert jnp.allclose(out2_bf16, ref2, atol=1e-1, rtol=1e-1)

    print("KERNEL_OK")
</pallas_src>

<mosaic_0001>
module attributes {stable_mosaic.version = 11 : i64} {
  func.func @fd_kernel(%arg0: memref<8x32xf32, #tpu.memory_space<vmem>>, %arg1: memref<32x32xf32, #tpu.memory_space<vmem>>, %arg2: memref<1x32xf32, #tpu.memory_space<vmem>>, %arg3: memref<32x16xf32, #tpu.memory_space<vmem>>, %arg4: memref<1x16xf32, #tpu.memory_space<vmem>>, %arg5: memref<8x16xf32, #tpu.memory_space<vmem>>) attributes {dimension_semantics = [], scalar_prefetch = 0 : i64, scratch_operands = 0 : i64, tpu.core_type = #tpu.core_type<tc>} {
    %c0 = arith.constant 0 : index
    %c0_0 = arith.constant 0 : index
    %0 = vector.load %arg0[%c0, %c0_0] : memref<8x32xf32, #tpu.memory_space<vmem>>, vector<8x32xf32>
    %c0_1 = arith.constant 0 : index
    %c0_2 = arith.constant 0 : index
    %1 = vector.load %arg1[%c0_1, %c0_2] : memref<32x32xf32, #tpu.memory_space<vmem>>, vector<32x32xf32>
    %cst = arith.constant dense<0.000000e+00> : vector<8x32xf32>
    %2 = tpu.matmul %0, %1, %cst {dimension_numbers = #tpu.dot_dimension_numbers<[1], [0], [0], [1], [0, 0, 1, 1], [], []>} : vector<8x32xf32>, vector<32x32xf32>, vector<8x32xf32> -> vector<8x32xf32>
    %c0_3 = arith.constant 0 : index
    %c0_4 = arith.constant 0 : index
    %3 = vector.load %arg2[%c0_3, %c0_4] : memref<1x32xf32, #tpu.memory_space<vmem>>, vector<1x32xf32>
    %4 = vector.broadcast %3 : vector<1x32xf32> to vector<8x32xf32>
    %5 = arith.addf %2, %4 : vector<8x32xf32>
    %cst_5 = arith.constant 0.000000e+00 : f32
    %6 = vector.broadcast %cst_5 : f32 to vector<8x32xf32>
    %7 = arith.maximumf %5, %6 : vector<8x32xf32>
    %c0_6 = arith.constant 0 : index
    %c0_7 = arith.constant 0 : index
    %8 = vector.load %arg3[%c0_6, %c0_7] : memref<32x16xf32, #tpu.memory_space<vmem>>, vector<32x16xf32>
    %cst_8 = arith.constant dense<0.000000e+00> : vector<8x16xf32>
    %9 = tpu.matmul %7, %8, %cst_8 {dimension_numbers = #tpu.dot_dimension_numbers<[1], [0], [0], [1], [0, 0, 1, 1], [], []>} : vector<8x32xf32>, vector<32x16xf32>, vector<8x16xf32> -> vector<8x16xf32>
    %c0_9 = arith.constant 0 : index
    %c0_10 = arith.constant 0 : index
    %10 = vector.load %arg4[%c0_9, %c0_10] : memref<1x16xf32, #tpu.memory_space<vmem>>, vector<1x16xf32>
    %11 = vector.broadcast %10 : vector<1x16xf32> to vector<8x16xf32>
    %12 = arith.addf %9, %11 : vector<8x16xf32>
    %c0_11 = arith.constant 0 : index
    %c0_12 = arith.constant 0 : index
    %13 = vector.load %arg5[%c0_11, %c0_12] : memref<8x16xf32, #tpu.memory_space<vmem>>, vector<8x16xf32>
    tpu.vector_store %arg5[%c0_11, %c0_12], %12 {strides = array<i32>} : memref<8x16xf32, #tpu.memory_space<vmem>>, vector<8x16xf32>,
    return
  }
}

</mosaic_0001>

<llo_original>
// kernel: tpu_custom_call.1
$region0: #{tpu_custom_call.1}
  #allocation0 [shape = 'u32[]', space=smem, size = 0x4, offset = 0x4, fixed_abs, tag = 'smem constant byte address 0x4 - core index']
  #allocation1 [shape = 'u32[144,128]{1,0:T(1,128)}', space=vmem, size = 0x12000, scoped, tag = 'internal scratch']
  %s0 = inlined_call_operand.vmem [shape: f32[8,32], index: 0, kind: input, shape index: {}]
  %s1 = inlined_call_operand.vmem [shape: f32[32,32], index: 1, kind: input, shape index: {}]
  %s2 = inlined_call_operand.vmem [shape: f32[1,32], index: 2, kind: input, shape index: {}]
  %s3 = inlined_call_operand.vmem [shape: f32[32,16], index: 3, kind: input, shape index: {}]
  %s4 = inlined_call_operand.vmem [shape: f32[1,16], index: 4, kind: input, shape index: {}]
  %s5 = inlined_call_operand.hbm [shape: f32[8,16], index: 5, kind: output, shape index: {}]
  %s6 = sld [smem:[#allocation0]]
  $region30: #{tpu_custom_call.1} parent=0
    _
  %s8 = ssub.s32 1, %s6
  %s9 = scalar_select 0, %s8, %s6
  $region1: #{tpu_custom_call.1} parent=0
    #allocation2 [shape = 'u8[4096]{0}', space=vmem, size = 0x1000, scoped, tag = 'output window, operand 0, single buffered']
    #allocation3 [shape = 's32[1]{0}', space=sflag, size = 0x4, scoped, tag = 'scoped memory for tpu_custom_call.1']
    %10 = vsyncpa [#allocation3], 0
    // Predicated region
    $region2: #{tpu_custom_call.1} parent=1 // pred_check
      _
    $region3: #{tpu_custom_call.1} parent=1 // pred_check_branch
      %12 = sbr.rel (0) target = $region5
    $region4: #{tpu_custom_call.1} parent=1 // pred_region
      _
    $region5: #{tpu_custom_call.1} parent=1 // pred_fallthru
      _
    // Predicated region
    $region6: #{tpu_custom_call.1} parent=1 // pred_check
      _
    $region7: #{tpu_custom_call.1} parent=1 // pred_check_branch
      %14 = sbr.rel (0) target = $region9
    $region8: #{tpu_custom_call.1} parent=1 // pred_region
      _
    $region9: #{tpu_custom_call.1} parent=1 // pred_fallthru
      _
    // Predicated region
    $region10: #{tpu_custom_call.1} parent=1 // pred_check
      _
    $region11: #{tpu_custom_call.1} parent=1 // pred_check_branch
      %16 = sbr.rel (0) target = $region13
    $region12: #{tpu_custom_call.1} parent=1 // pred_region
      _
    $region13: #{tpu_custom_call.1} parent=1 // pred_fallthru
      _
    // Predicated region
    $region14: #{tpu_custom_call.1} parent=1 // pred_check
      _
    $region15: #{tpu_custom_call.1} parent=1 // pred_check_branch
      %18 = sbr.rel (0) target = $region17
    $region16: #{tpu_custom_call.1} parent=1 // pred_region
      _
    $region17: #{tpu_custom_call.1} parent=1 // pred_fallthru
      _
    // Predicated region
    $region18: #{tpu_custom_call.1} parent=1 // pred_check
      _
    $region19: #{tpu_custom_call.1} parent=1 // pred_check_branch
      %20 = sbr.rel (0) target = $region21
    $region20: #{tpu_custom_call.1} parent=1 // pred_region
      _
    $region21: #{tpu_custom_call.1} parent=1 // pred_fallthru
      _
    %v21 = vld [vmem:[%s0] sm:$0xff]
    %v22 = vld [vmem:[%s1] sm:$0xff]
    %v23 = vld [vmem:[%s1 + $0x8] sm:$0xff]
    %v24 = vld [vmem:[%s1 + $0x10] sm:$0xff]
    %v25 = vld [vmem:[%s1 + $0x18] sm:$0xff]
    %v26 = vld [vmem:[%s2] sm:$0x1]
    %v28 = vlaneseq
    %v29 = vshrl.u32 %v28, 7
    %v30 = vsub.s32 0, %v29
    %v31 = vrot.slane %v26, %v30
    %vm33 = vcmask 261120
    %v35 = vsel %vm33, %v21, 0
    %37 = vmatprep.subr.mxu0 0.0
    %38 = vmatpush1.msra.mxu0 %v22
    %39 = vmatprep.subr.mxu0 0.0
    %40 = vmatpush1.msra.mxu0 %v23
    %41 = vmatprep.subr.mxu0 0.0
    %42 = vmatpush1.msra.mxu0 %v24
    %43 = vmatprep.subr.mxu0 0.0
    %44 = vmatpush1.msra.mxu0 %v25
    %45 = vmatprep.subr.mxu0 0.0
    %46 = vmatpush1.msra.mxu0 0.0
    %47 = vmatprep.subr.mxu0 0.0
    %48 = vmatpush1.msra.mxu0 0.0
    %49 = vmatprep.subr.mxu0 0.0
    %50 = vmatpush1.msra.mxu0 0.0
    %51 = vmatprep.subr.mxu0 0.0
    %52 = vmatpush1.msra.mxu0 0.0
    %53 = vmatprep.subr.mxu0 0.0
    %54 = vmatpush1.msra.mxu0 0.0
    %55 = vmatprep.subr.mxu0 0.0
    %56 = vmatpush1.msra.mxu0 0.0
    %57 = vmatprep.subr.mxu0 0.0
    %58 = vmatpush1.msra.mxu0 0.0
    %59 = vmatprep.subr.mxu0 0.0
    %60 = vmatpush1.msra.mxu0 0.0
    %61 = vmatprep.subr.mxu0 0.0
    %62 = vmatpush1.msra.mxu0 0.0
    %63 = vmatprep.subr.mxu0 0.0
    %64 = vmatpush1.msra.mxu0 0.0
    %65 = vmatprep.subr.mxu0 0.0
    %66 = vmatpush1.msra.mxu0 0.0
    %67 = vmatprep.subr.mxu0 0.0
    %68 = vmatpush1.msra.mxu0 0.0
    %69 = vmatprep.subr.mxu0 0.0
    %70 = vmatpush1.msra.mxu0 0.0
    %71 = vmatprep.subr.mxu0 0.0
    %72 = vmatpush1.msra.mxu0 0.0
    %73 = vmatprep.subr.mxu0 0.0
    %74 = vmatpush1.msra.mxu0 0.0
    %75 = vmatprep.subr.mxu0 0.0
    %76 = vmatpush1.msra.mxu0 0.0
    %77 = vmatprep.subr.mxu0 0.0
    %78 = vmatpush1.msra.mxu0 0.0
    %79 = vmatprep.subr.mxu0 0.0
    %80 = vmatpush1.msra.mxu0 0.0
    %81 = vmatprep.subr.mxu0 0.0
    %82 = vmatpush1.msra.mxu0 0.0
    %83 = vmatprep.subr.mxu0 0.0
    %84 = vmatpush1.msra.mxu0 0.0
    %85 = vmatprep.subr.mxu0 0.0
    %86 = vmatpush1.msra.mxu0 0.0
    %87 = vmatprep.subr.mxu0 0.0
    %88 = vmatpush1.msra.mxu0 0.0
    %89 = vmatprep.subr.mxu0 0.0
    %90 = vmatpush1.msra.mxu0 0.0
    %91 = vmatprep.subr.mxu0 0.0
    %92 = vmatpush1.msra.mxu0 0.0
    %93 = vmatprep.subr.mxu0 0.0
    %94 = vmatpush1.msra.mxu0 0.0
    %95 = vmatprep.subr.mxu0 0.0
    %96 = vmatpush1.msra.mxu0 0.0
    %97 = vmatprep.subr.mxu0 0.0
    %98 = vmatpush1.msra.mxu0 0.0
    %99 = vmatprep.subr.mxu0 0.0
    %100 = vmatpush1.msra.mxu0 0.0
    %101 = vmatprep.mubr.f32.mxu0 0.0
    %102 = vmatmul.mubr.f32.gmra.mrb[0].mxu0 %v35
    %v103 = vpop.f32.mrb[0].mxu0
    %v104 = vadd.f32 %v31, %v103
    %v105 = vpop.f32.mrb[0].mxu0
    %106 = vdwg.mxu0
    %v107 = vmax.f32 %v104, 0.0
    %v108 = vld [vmem:[%s3] sm:$0xff]
    %v109 = vld [vmem:[%s3 + $0x8] sm:$0xff]
    %v110 = vld [vmem:[%s3 + $0x10] sm:$0xff]
    %v111 = vld [vmem:[%s3 + $0x18] sm:$0xff]
    %v112 = vld [vmem:[%s4] sm:$0x1]
    %v114 = vlaneseq
    %v115 = vshrl.u32 %v114, 7
    %v116 = vsub.s32 0, %v115
    %v117 = vrot.slane %v112, %v116
    %v120 = vsel %vm33, %v107, 0
    %122 = vmatprep.subr.mxu0 0.0
    %123 = vmatpush1.msra.mxu0 %v108
    %124 = vmatprep.subr.mxu0 0.0
    %125 = vmatpush1.msra.mxu0 %v109
    %126 = vmatprep.subr.mxu0 0.0
    %127 = vmatpush1.msra.mxu0 %v110
    %128 = vmatprep.subr.mxu0 0.0
    %129 = vmatpush1.msra.mxu0 %v111
    %130 = vmatprep.subr.mxu0 0.0
    %131 = vmatpush1.msra.mxu0 0.0
    %132 = vmatprep.subr.mxu0 0.0
    %133 = vmatpush1.msra.mxu0 0.0
    %134 = vmatprep.subr.mxu0 0.0
    %135 = vmatpush1.msra.mxu0 0.0
    %136 = vmatprep.subr.mxu0 0.0
    %137 = vmatpush1.msra.mxu0 0.0
    %138 = vmatprep.subr.mxu0 0.0
    %139 = vmatpush1.msra.mxu0 0.0
    %140 = vmatprep.subr.mxu0 0.0
    %141 = vmatpush1.msra.mxu0 0.0
    %142 = vmatprep.subr.mxu0 0.0
    %143 = vmatpush1.msra.mxu0 0.0
    %144 = vmatprep.subr.mxu0 0.0
    %145 = vmatpush1.msra.mxu0 0.0
    %146 = vmatprep.subr.mxu0 0.0
    %147 = vmatpush1.msra.mxu0 0.0
    %148 = vmatprep.subr.mxu0 0.0
    %149 = vmatpush1.msra.mxu0 0.0
    %150 = vmatprep.subr.mxu0 0.0
    %151 = vmatpush1.msra.mxu0 0.0
    %152 = vmatprep.subr.mxu0 0.0
    %153 = vmatpush1.msra.mxu0 0.0
    %154 = vmatprep.subr.mxu0 0.0
    %155 = vmatpush1.msra.mxu0 0.0
    %156 = vmatprep.subr.mxu0 0.0
    %157 = vmatpush1.msra.mxu0 0.0
    %158 = vmatprep.subr.mxu0 0.0
    %159 = vmatpush1.msra.mxu0 0.0
    %160 = vmatprep.subr.mxu0 0.0
    %161 = vmatpush1.msra.mxu0 0.0
    %162 = vmatprep.subr.mxu0 0.0
    %163 = vmatpush1.msra.mxu0 0.0
    %164 = vmatprep.subr.mxu0 0.0
    %165 = vmatpush1.msra.mxu0 0.0
    %166 = vmatprep.subr.mxu0 0.0
    %167 = vmatpush1.msra.mxu0 0.0
    %168 = vmatprep.subr.mxu0 0.0
    %169 = vmatpush1.msra.mxu0 0.0
    %170 = vmatprep.subr.mxu0 0.0
    %171 = vmatpush1.msra.mxu0 0.0
    %172 = vmatprep.subr.mxu0 0.0
    %173 = vmatpush1.msra.mxu0 0.0
    %174 = vmatprep.subr.mxu0 0.0
    %175 = vmatpush1.msra.mxu0 0.0
    %176 = vmatprep.subr.mxu0 0.0
    %177 = vmatpush1.msra.mxu0 0.0
    %178 = vmatprep.subr.mxu0 0.0
    %179 = vmatpush1.msra.mxu0 0.0
    %180 = vmatprep.subr.mxu0 0.0
    %181 = vmatpush1.msra.mxu0 0.0
    %182 = vmatprep.subr.mxu0 0.0
    %183 = vmatpush1.msra.mxu0 0.0
    %184 = vmatprep.subr.mxu0 0.0
    %185 = vmatpush1.msra.mxu0 0.0
    %186 = vmatprep.mubr.f32.mxu0 0.0
    %187 = vmatmul.mubr.f32.gmra.mrb[0].mxu0 %v120
    %v188 = vpop.f32.mrb[0].mxu0
    %v189 = vadd.f32 %v117, %v188
    %v190 = vpop.f32.mrb[0].mxu0
    %191 = vdwg.mxu0
    %vm192 = vcmask 130048
    %193 = vst.msk [vmem:[#allocation2] sm:$0xff] %vm192, %v189
    // Predicated region
    $region22: #{tpu_custom_call.1} parent=1 // pred_check
      _
    $region23: #{tpu_custom_call.1} parent=1 // pred_check_branch
      %195 = sbr.rel (0) target = $region25
    $region24: #{tpu_custom_call.1} parent=1 // pred_region
      %s197 = ssub.s32 128, 128
      %198 = vsyncadd [#allocation3], %s197
      %s200 = sshll.u32 [#allocation2], 4
      %s201 = int_to_ptr.vmem [resolvable:$true] %s200
      %203 = dma.vmem_to_hbm [thread:$0]  %s201, 128, %s5, [#allocation3]
    $region25: #{tpu_custom_call.1} parent=1 // pred_fallthru
      _
    // Predicated region
    $region26: #{tpu_custom_call.1} parent=1 // pred_check
      _
    $region27: #{tpu_custom_call.1} parent=1 // pred_check_branch
      %205 = sbr.rel (0) target = $region29
    $region28: #{tpu_custom_call.1} parent=1 // pred_region
      %206 = dma.done [#allocation3], 128
    $region29: #{tpu_custom_call.1} parent=1 // pred_fallthru
      _
    %207 = vsyncpa [#allocation3], 1

</llo_original>
